<compile_context>
chip_gen: v7x
topology: tpu7x:2x2x1
jax: 0.10.0
libtpu: 0.0.40
codegen_flags: <defaults>
</compile_context>

<pallas_src>
import functools

import jax
import jax.numpy as jnp
from jax import lax
from jax.experimental import pallas as pl
from jax.experimental.pallas import tpu as pltpu

C_IN, C_OUT, KH, KW, STRIDE, PAD = 64, 1, 3, 3, 4, 1


def _fused_conv_kernel(x_ref, w_ref, b_ref, out_ref, carry_ref, *,
                       tile_oh, h_img, w_img, band_h, tiled):
    """One (batch, row-block) grid step of Conv2d(64->1, 3x3, stride 4, pad 1).

    x_ref:     (1, C_IN, band_elems)  flat row-major (row, col) input band
    w_ref:     (KW, KH*C_IN)          weights, index [kx, ky*C_IN + c]
    b_ref:     (1,)                   bias (SMEM)
    out_ref:   (1, tile_oh, w_img)    stride-(4,1) "wide" output rows
    carry_ref: (C_IN, w_img)          last input row of the previous band
    """
    i = pl.program_id(1)
    bias = b_ref[0]
    wmat = w_ref[...]                                   # (3, 3*C_IN), resident
    zcol = jnp.zeros((1, 1), jnp.float32)
    zrow = jnp.zeros((C_IN, w_img), jnp.float32)

    if tiled:
        # Halo = global input row i*band_h - 1.  At i == 0 it is the top
        # zero-pad row, otherwise it was carried over from the previous band.
        halo = jnp.where(i > 0, carry_ref[...], 0.0)
        row0 = i * band_h
    else:
        halo = zrow
        row0 = 0

    for j in range(tile_oh):
        # Output row oy = row0//4 + j uses band-local input rows 4j-1, 4j, 4j+1.
        if j == 0:
            s_top = halo
        else:
            s_top = x_ref[0, :, (4 * j - 1) * w_img:(4 * j) * w_img]
        s_mid = x_ref[0, :, (4 * j) * w_img:(4 * j + 1) * w_img]
        if tiled:
            s_bot = x_ref[0, :, (4 * j + 1) * w_img:(4 * j + 2) * w_img]
            s_bot = jnp.where(row0 + 4 * j + 1 < h_img, s_bot, 0.0)
        else:
            if 4 * j + 1 < h_img:
                s_bot = x_ref[0, :, (4 * j + 1) * w_img:(4 * j + 2) * w_img]
            else:
                s_bot = zrow                           # bottom zero-pad row
        sc = jnp.concatenate([s_top, s_mid, s_bot], axis=0)       # (3*C_IN, W)
        # Channel / ky contraction for the 3 kx taps at every column -> MXU.
        d = jnp.dot(wmat, sc, preferred_element_type=jnp.float32)  # (3, W)
        # out_wide[w] = d[0, w-1] + d[1, w] + d[2, w+1] (zero pads at the edges).
        left = jnp.concatenate([zcol, d[0:1, :w_img - 1]], axis=1)
        right = jnp.concatenate([d[2:3, 1:], zcol], axis=1)
        out_ref[0, j, :] = d[1, :] + left[0] + right[0] + bias

    if tiled:
        # Save this band's last input row for the next band's ky=0 / j=0 tap.
        carry_ref[...] = x_ref[0, :, (band_h - 1) * w_img:band_h * w_img]


def _choose_tiling(h, w, oh):
    """Pick tile_oh (output rows per band) honoring the (8,128) block rules."""
    m = 8
    while (m * w) % 32 != 0:        # ensure (4*tile_oh*w) % 128 == 0
        m *= 2                      # m in {8, 16, 32}
    full_band_bytes = C_IN * h * w * 4
    if oh <= m or (oh <= 32 and full_band_bytes <= (6 << 20)):
        return oh, True             # one band covers the whole image
    target = 4 << 20                # ~4 MB band -> ~8 MB double-buffered
    t = (target // (C_IN * 4 * 4 * w)) // m * m
    t = max(m, min(t, 32))          # also bounds the unrolled j-loop
    if t >= oh:
        return oh, True
    return t, False


def adapter1_forward(x, weight, bias):
    """x: (N, 64, H, W) f32; weight: (1, 64, 3, 3); bias: (1,) -> (N, 1, OH, OW)."""
    n, c, h, w = x.shape
    assert c == C_IN, f"expected {C_IN} input channels, got {c}"
    oh = (h + 2 * PAD - KH) // STRIDE + 1
    ow = (w + 2 * PAD - KW) // STRIDE + 1

    tile_oh, single = _choose_tiling(h, w, oh)
    band_h = 4 * tile_oh
    band_elems = h * w if single else band_h * w
    n_row_blocks = 1 if single else pl.cdiv(oh, tile_oh)

    x3 = x.reshape(n, c, h * w)                         # free reshape (no copy)
    wl = jnp.transpose(weight.reshape(C_OUT, C_IN, KH, KW)[0], (2, 1, 0))
    wl = wl.reshape(KW, KH * C_IN).astype(jnp.float32)  # [kx, ky*C + c]
    b1 = jnp.asarray(bias, jnp.float32).reshape(C_OUT)

    band_bytes = C_IN * band_elems * 4
    vmem_need = 2 * band_bytes + 2 * tile_oh * w * 4 + C_IN * w * 4 + (4 << 20)
    vmem_limit = int(min(max(vmem_need, 16 << 20), 48 << 20))

    kernel = functools.partial(_fused_conv_kernel, tile_oh=tile_oh, h_img=h,
                               w_img=w, band_h=band_h, tiled=not single)

    out_wide = pl.pallas_call(
        kernel,
        out_shape=jax.ShapeDtypeStruct((n, oh, w), jnp.float32),
        grid=(n, n_row_blocks),
        in_specs=[
            pl.BlockSpec((1, C_IN, band_elems), lambda b, i: (b, 0, i)),
            pl.BlockSpec((KW, KH * C_IN), lambda b, i: (0, 0)),
            pl.BlockSpec(memory_space=pltpu.MemorySpace.SMEM),
        ],
        out_specs=pl.BlockSpec((1, tile_oh, w), lambda b, i: (b, i, 0)),
        scratch_shapes=[pltpu.VMEM((C_IN, w), jnp.float32)],
        compiler_params=pltpu.CompilerParams(
            dimension_semantics=("parallel", "arbitrary"),
            vmem_limit_bytes=vmem_limit),
        cost_estimate=pl.CostEstimate(
            flops=2 * n * oh * ow * C_IN * KH * KW,
            transcendentals=0,
            bytes_accessed=x.size * 4 + n * oh * w * 4),
    )(x3, wl, b1)

    # Keep every 4th column of the stride-(4,1) wide result (tiny tensor).
    y = out_wide[:, :, ::STRIDE][:, :, :ow]
    return y[:, None, :, :].astype(x.dtype)


adapter1_forward = jax.jit(adapter1_forward)


def _init_params(key):
    # PyTorch Conv2d default-ish init: uniform(-1/sqrt(fan_in), 1/sqrt(fan_in)).
    kw_key, kb_key = jax.random.split(key)
    fan_in = C_IN * KH * KW
    bound = float(fan_in) ** -0.5
    weight = jax.random.uniform(kw_key, (C_OUT, C_IN, KH, KW),
                                dtype=jnp.float32, minval=-bound, maxval=bound)
    bias = jax.random.uniform(kb_key, (C_OUT,),
                              dtype=jnp.float32, minval=-bound, maxval=bound)
    return weight, bias


if __name__ == "__main__":
    key = jax.random.PRNGKey(0)
    k_x1, k_x2, k_p = jax.random.split(key, 3)
    weight, bias = _init_params(k_p)

    def reference(x):
        out = lax.conv_general_dilated(
            x, weight, window_strides=(STRIDE, STRIDE),
            padding=((PAD, PAD), (PAD, PAD)),
            dimension_numbers=("NCHW", "OIHW", "NCHW"),
            precision=lax.Precision.HIGHEST)
        return out + bias.reshape(1, C_OUT, 1, 1)

    # Small shape consistent with the module (64 input channels required).
    x1 = jax.random.normal(k_x1, (2, C_IN, 16, 16), dtype=jnp.float32)
    y1 = jax.block_until_ready(adapter1_forward(x1, weight, bias))
    assert y1.shape == (2, C_OUT, 4, 4), y1.shape
    err1 = float(jnp.max(jnp.abs(y1 - reference(x1))))
    assert err1 < 1e-3, err1

    # Larger shape exercising the tiled path: carry halo, partial input/output
    # blocks, bottom zero-pad row (H % 4 == 1) and the raised VMEM limit.
    x2 = jax.random.normal(k_x2, (1, C_IN, 37, 1024), dtype=jnp.float32)
    y2 = jax.block_until_ready(adapter1_forward(x2, weight, bias))
    assert y2.shape == (1, C_OUT, 10, 256), y2.shape
    err2 = float(jnp.max(jnp.abs(y2 - reference(x2))))
    assert err2 < 1e-3, err2

    print("KERNEL_OK")
</pallas_src>

<mosaic_0001>
module attributes {stable_mosaic.version = 11 : i64} {
  func.func @_fused_conv_kernel(%arg0: i32, %arg1: i32, %arg2: memref<1x64x256xf32, #tpu.memory_space<vmem>>, %arg3: memref<3x192xf32, #tpu.memory_space<vmem>>, %arg4: memref<1xf32, #tpu.memory_space<smem>>, %arg5: memref<1x4x16xf32, #tpu.memory_space<vmem>>, %arg6: memref<64x16xf32, #tpu.memory_space<vmem>>) attributes {dimension_semantics = [#tpu.dimension_semantics<parallel>, #tpu.dimension_semantics<arbitrary>], iteration_bounds = array<i64: 2, 1>, scalar_prefetch = 0 : i64, scratch_operands = 1 : i64, tpu.core_type = #tpu.core_type<tc>, window_params = [{transform_indices = @transform_0, window_bounds = array<i64: 1, 64, 256>}, {pipeline_mode = #tpu.pipeline_mode<synchronous>, transform_indices = @transform_1, window_bounds = array<i64: 3, 192>}, {transform_indices = @transform_2, window_bounds = array<i64: 1>}, {transform_indices = @transform_3, window_bounds = array<i64: 1, 4, 16>}]} {
    %c0 = arith.constant 0 : index
    %0 = memref.load %arg4[%c0] : memref<1xf32, #tpu.memory_space<smem>>
    %c0_0 = arith.constant 0 : index
    %c0_1 = arith.constant 0 : index
    %1 = vector.load %arg3[%c0_0, %c0_1] : memref<3x192xf32, #tpu.memory_space<vmem>>, vector<3x192xf32>
    %cst = arith.constant 0.000000e+00 : f32
    %2 = vector.broadcast %cst : f32 to vector<1x1xf32>
    %cst_2 = arith.constant 0.000000e+00 : f32
    %3 = vector.broadcast %cst_2 : f32 to vector<64x16xf32>
    %c0_3 = arith.constant 0 : index
    %c0_4 = arith.constant 0 : index
    %c0_5 = arith.constant 0 : index
    %4 = vector.load %arg2[%c0_3, %c0_4, %c0_5] : memref<1x64x256xf32, #tpu.memory_space<vmem>>, vector<1x64x16xf32>
    %5 = vector.shape_cast %4 : vector<1x64x16xf32> to vector<64x16xf32>
    %c0_6 = arith.constant 0 : index
    %c0_7 = arith.constant 0 : index
    %c16 = arith.constant 16 : index
    %6 = vector.load %arg2[%c0_6, %c0_7, %c16] : memref<1x64x256xf32, #tpu.memory_space<vmem>>, vector<1x64x16xf32>
    %7 = vector.shape_cast %6 : vector<1x64x16xf32> to vector<64x16xf32>
    %8 = tpu.concatenate %3, %5, %7 in 0 : vector<64x16xf32>, vector<64x16xf32>, vector<64x16xf32> -> vector<192x16xf32>
    %cst_8 = arith.constant dense<0.000000e+00> : vector<3x16xf32>
    %9 = tpu.matmul %1, %8, %cst_8 {dimension_numbers = #tpu.dot_dimension_numbers<[1], [0], [0], [1], [0, 0, 1, 1], [], []>} : vector<3x192xf32>, vector<192x16xf32>, vector<3x16xf32> -> vector<3x16xf32>
    %10 = vector.extract_strided_slice %9 {offsets = [0, 0], sizes = [1, 15], strides = [1, 1]} : vector<3x16xf32> to vector<1x15xf32>
    %11 = tpu.concatenate %2, %10 in 1 : vector<1x1xf32>, vector<1x15xf32> -> vector<1x16xf32>
    %12 = vector.extract_strided_slice %9 {offsets = [2, 1], sizes = [1, 15], strides = [1, 1]} : vector<3x16xf32> to vector<1x15xf32>
    %13 = tpu.concatenate %12, %2 in 1 : vector<1x15xf32>, vector<1x1xf32> -> vector<1x16xf32>
    %14 = vector.extract_strided_slice %9 {offsets = [1, 0], sizes = [1, 16], strides = [1, 1]} : vector<3x16xf32> to vector<1x16xf32>
    %15 = vector.shape_cast %14 : vector<1x16xf32> to vector<16xf32>
    %16 = vector.shape_cast %11 : vector<1x16xf32> to vector<16xf32>
    %17 = arith.addf %15, %16 : vector<16xf32>
    %18 = vector.shape_cast %13 : vector<1x16xf32> to vector<16xf32>
    %19 = arith.addf %17, %18 : vector<16xf32>
    %20 = vector.broadcast %0 : f32 to vector<16xf32>
    %21 = arith.addf %19, %20 : vector<16xf32>
    %c0_9 = arith.constant 0 : index
    %c0_10 = arith.constant 0 : index
    %c0_11 = arith.constant 0 : index
    %22 = vector.load %arg5[%c0_9, %c0_10, %c0_11] : memref<1x4x16xf32, #tpu.memory_space<vmem>>, vector<1x1x16xf32>
    %23 = vector.shape_cast %22 : vector<1x1x16xf32> to vector<16xf32>
    %24 = vector.shape_cast %21 : vector<16xf32> to vector<1x1x16xf32>
    tpu.vector_store %arg5[%c0_9, %c0_10, %c0_11], %24 {strides = array<i32>} : memref<1x4x16xf32, #tpu.memory_space<vmem>>, vector<1x1x16xf32>,
    %c0_12 = arith.constant 0 : index
    %c0_13 = arith.constant 0 : index
    %c48 = arith.constant 48 : index
    %25 = vector.load %arg2[%c0_12, %c0_13, %c48] : memref<1x64x256xf32, #tpu.memory_space<vmem>>, vector<1x64x16xf32>
    %26 = vector.shape_cast %25 : vector<1x64x16xf32> to vector<64x16xf32>
    %c0_14 = arith.constant 0 : index
    %c0_15 = arith.constant 0 : index
    %c64 = arith.constant 64 : index
    %27 = vector.load %arg2[%c0_14, %c0_15, %c64] : memref<1x64x256xf32, #tpu.memory_space<vmem>>, vector<1x64x16xf32>
    %28 = vector.shape_cast %27 : vector<1x64x16xf32> to vector<64x16xf32>
    %c0_16 = arith.constant 0 : index
    %c0_17 = arith.constant 0 : index
    %c80 = arith.constant 80 : index
    %29 = vector.load %arg2[%c0_16, %c0_17, %c80] : memref<1x64x256xf32, #tpu.memory_space<vmem>>, vector<1x64x16xf32>
    %30 = vector.shape_cast %29 : vector<1x64x16xf32> to vector<64x16xf32>
    %31 = tpu.concatenate %26, %28, %30 in 0 : vector<64x16xf32>, vector<64x16xf32>, vector<64x16xf32> -> vector<192x16xf32>
    %cst_18 = arith.constant dense<0.000000e+00> : vector<3x16xf32>
    %32 = tpu.matmul %1, %31, %cst_18 {dimension_numbers = #tpu.dot_dimension_numbers<[1], [0], [0], [1], [0, 0, 1, 1], [], []>} : vector<3x192xf32>, vector<192x16xf32>, vector<3x16xf32> -> vector<3x16xf32>
    %33 = vector.extract_strided_slice %32 {offsets = [0, 0], sizes = [1, 15], strides = [1, 1]} : vector<3x16xf32> to vector<1x15xf32>
    %34 = tpu.concatenate %2, %33 in 1 : vector<1x1xf32>, vector<1x15xf32> -> vector<1x16xf32>
    %35 = vector.extract_strided_slice %32 {offsets = [2, 1], sizes = [1, 15], strides = [1, 1]} : vector<3x16xf32> to vector<1x15xf32>
    %36 = tpu.concatenate %35, %2 in 1 : vector<1x15xf32>, vector<1x1xf32> -> vector<1x16xf32>
    %37 = vector.extract_strided_slice %32 {offsets = [1, 0], sizes = [1, 16], strides = [1, 1]} : vector<3x16xf32> to vector<1x16xf32>
    %38 = vector.shape_cast %37 : vector<1x16xf32> to vector<16xf32>
    %39 = vector.shape_cast %34 : vector<1x16xf32> to vector<16xf32>
    %40 = arith.addf %38, %39 : vector<16xf32>
    %41 = vector.shape_cast %36 : vector<1x16xf32> to vector<16xf32>
    %42 = arith.addf %40, %41 : vector<16xf32>
    %43 = vector.broadcast %0 : f32 to vector<16xf32>
    %44 = arith.addf %42, %43 : vector<16xf32>
    %c0_19 = arith.constant 0 : index
    %c1 = arith.constant 1 : index
    %c0_20 = arith.constant 0 : index
    %45 = vector.load %arg5[%c0_19, %c1, %c0_20] : memref<1x4x16xf32, #tpu.memory_space<vmem>>, vector<1x1x16xf32>
    %46 = vector.shape_cast %45 : vector<1x1x16xf32> to vector<16xf32>
    %47 = vector.shape_cast %44 : vector<16xf32> to vector<1x1x16xf32>
    tpu.vector_store %arg5[%c0_19, %c1, %c0_20], %47 {strides = array<i32>} : memref<1x4x16xf32, #tpu.memory_space<vmem>>, vector<1x1x16xf32>,
    %c0_21 = arith.constant 0 : index
    %c0_22 = arith.constant 0 : index
    %c112 = arith.constant 112 : index
    %48 = vector.load %arg2[%c0_21, %c0_22, %c112] : memref<1x64x256xf32, #tpu.memory_space<vmem>>, vector<1x64x16xf32>
    %49 = vector.shape_cast %48 : vector<1x64x16xf32> to vector<64x16xf32>
    %c0_23 = arith.constant 0 : index
    %c0_24 = arith.constant 0 : index
    %c128 = arith.constant 128 : index
    %50 = vector.load %arg2[%c0_23, %c0_24, %c128] : memref<1x64x256xf32, #tpu.memory_space<vmem>>, vector<1x64x16xf32>
    %51 = vector.shape_cast %50 : vector<1x64x16xf32> to vector<64x16xf32>
    %c0_25 = arith.constant 0 : index
    %c0_26 = arith.constant 0 : index
    %c144 = arith.constant 144 : index
    %52 = vector.load %arg2[%c0_25, %c0_26, %c144] : memref<1x64x256xf32, #tpu.memory_space<vmem>>, vector<1x64x16xf32>
    %53 = vector.shape_cast %52 : vector<1x64x16xf32> to vector<64x16xf32>
    %54 = tpu.concatenate %49, %51, %53 in 0 : vector<64x16xf32>, vector<64x16xf32>, vector<64x16xf32> -> vector<192x16xf32>
    %cst_27 = arith.constant dense<0.000000e+00> : vector<3x16xf32>
    %55 = tpu.matmul %1, %54, %cst_27 {dimension_numbers = #tpu.dot_dimension_numbers<[1], [0], [0], [1], [0, 0, 1, 1], [], []>} : vector<3x192xf32>, vector<192x16xf32>, vector<3x16xf32> -> vector<3x16xf32>
    %56 = vector.extract_strided_slice %55 {offsets = [0, 0], sizes = [1, 15], strides = [1, 1]} : vector<3x16xf32> to vector<1x15xf32>
    %57 = tpu.concatenate %2, %56 in 1 : vector<1x1xf32>, vector<1x15xf32> -> vector<1x16xf32>
    %58 = vector.extract_strided_slice %55 {offsets = [2, 1], sizes = [1, 15], strides = [1, 1]} : vector<3x16xf32> to vector<1x15xf32>
    %59 = tpu.concatenate %58, %2 in 1 : vector<1x15xf32>, vector<1x1xf32> -> vector<1x16xf32>
    %60 = vector.extract_strided_slice %55 {offsets = [1, 0], sizes = [1, 16], strides = [1, 1]} : vector<3x16xf32> to vector<1x16xf32>
    %61 = vector.shape_cast %60 : vector<1x16xf32> to vector<16xf32>
    %62 = vector.shape_cast %57 : vector<1x16xf32> to vector<16xf32>
    %63 = arith.addf %61, %62 : vector<16xf32>
    %64 = vector.shape_cast %59 : vector<1x16xf32> to vector<16xf32>
    %65 = arith.addf %63, %64 : vector<16xf32>
    %66 = vector.broadcast %0 : f32 to vector<16xf32>
    %67 = arith.addf %65, %66 : vector<16xf32>
    %c0_28 = arith.constant 0 : index
    %c2 = arith.constant 2 : index
    %c0_29 = arith.constant 0 : index
    %68 = vector.load %arg5[%c0_28, %c2, %c0_29] : memref<1x4x16xf32, #tpu.memory_space<vmem>>, vector<1x1x16xf32>
    %69 = vector.shape_cast %68 : vector<1x1x16xf32> to vector<16xf32>
    %70 = vector.shape_cast %67 : vector<16xf32> to vector<1x1x16xf32>
    tpu.vector_store %arg5[%c0_28, %c2, %c0_29], %70 {strides = array<i32>} : memref<1x4x16xf32, #tpu.memory_space<vmem>>, vector<1x1x16xf32>,
    %c0_30 = arith.constant 0 : index
    %c0_31 = arith.constant 0 : index
    %c176 = arith.constant 176 : index
    %71 = vector.load %arg2[%c0_30, %c0_31, %c176] : memref<1x64x256xf32, #tpu.memory_space<vmem>>, vector<1x64x16xf32>
    %72 = vector.shape_cast %71 : vector<1x64x16xf32> to vector<64x16xf32>
    %c0_32 = arith.constant 0 : index
    %c0_33 = arith.constant 0 : index
    %c192 = arith.constant 192 : index
    %73 = vector.load %arg2[%c0_32, %c0_33, %c192] : memref<1x64x256xf32, #tpu.memory_space<vmem>>, vector<1x64x16xf32>
    %74 = vector.shape_cast %73 : vector<1x64x16xf32> to vector<64x16xf32>
    %c0_34 = arith.constant 0 : index
    %c0_35 = arith.constant 0 : index
    %c208 = arith.constant 208 : index
    %75 = vector.load %arg2[%c0_34, %c0_35, %c208] : memref<1x64x256xf32, #tpu.memory_space<vmem>>, vector<1x64x16xf32>
    %76 = vector.shape_cast %75 : vector<1x64x16xf32> to vector<64x16xf32>
    %77 = tpu.concatenate %72, %74, %76 in 0 : vector<64x16xf32>, vector<64x16xf32>, vector<64x16xf32> -> vector<192x16xf32>
    %cst_36 = arith.constant dense<0.000000e+00> : vector<3x16xf32>
    %78 = tpu.matmul %1, %77, %cst_36 {dimension_numbers = #tpu.dot_dimension_numbers<[1], [0], [0], [1], [0, 0, 1, 1], [], []>} : vector<3x192xf32>, vector<192x16xf32>, vector<3x16xf32> -> vector<3x16xf32>
    %79 = vector.extract_strided_slice %78 {offsets = [0, 0], sizes = [1, 15], strides = [1, 1]} : vector<3x16xf32> to vector<1x15xf32>
    %80 = tpu.concatenate %2, %79 in 1 : vector<1x1xf32>, vector<1x15xf32> -> vector<1x16xf32>
    %81 = vector.extract_strided_slice %78 {offsets = [2, 1], sizes = [1, 15], strides = [1, 1]} : vector<3x16xf32> to vector<1x15xf32>
    %82 = tpu.concatenate %81, %2 in 1 : vector<1x15xf32>, vector<1x1xf32> -> vector<1x16xf32>
    %83 = vector.extract_strided_slice %78 {offsets = [1, 0], sizes = [1, 16], strides = [1, 1]} : vector<3x16xf32> to vector<1x16xf32>
    %84 = vector.shape_cast %83 : vector<1x16xf32> to vector<16xf32>
    %85 = vector.shape_cast %80 : vector<1x16xf32> to vector<16xf32>
    %86 = arith.addf %84, %85 : vector<16xf32>
    %87 = vector.shape_cast %82 : vector<1x16xf32> to vector<16xf32>
    %88 = arith.addf %86, %87 : vector<16xf32>
    %89 = vector.broadcast %0 : f32 to vector<16xf32>
    %90 = arith.addf %88, %89 : vector<16xf32>
    %c0_37 = arith.constant 0 : index
    %c3 = arith.constant 3 : index
    %c0_38 = arith.constant 0 : index
    %91 = vector.load %arg5[%c0_37, %c3, %c0_38] : memref<1x4x16xf32, #tpu.memory_space<vmem>>, vector<1x1x16xf32>
    %92 = vector.shape_cast %91 : vector<1x1x16xf32> to vector<16xf32>
    %93 = vector.shape_cast %90 : vector<16xf32> to vector<1x1x16xf32>
    tpu.vector_store %arg5[%c0_37, %c3, %c0_38], %93 {strides = array<i32>} : memref<1x4x16xf32, #tpu.memory_space<vmem>>, vector<1x1x16xf32>,
    return
  }
  func.func @transform_0(%arg0: i32, %arg1: i32) -> (i32, i32, i32) {
    %c0_i32 = arith.constant 0 : i32
    %c0_i32_0 = arith.constant 0 : i32
    return %arg0, %c0_i32, %arg1 : i32, i32, i32
  }
  func.func @transform_1(%arg0: i32, %arg1: i32) -> (i32, i32) {
    %c0_i32 = arith.constant 0 : i32
    %c0_i32_0 = arith.constant 0 : i32
    %c0_i32_1 = arith.constant 0 : i32
    return %c0_i32, %c0_i32_0 : i32, i32
  }
  func.func @transform_2(%arg0: i32, %arg1: i32) -> i32 {
    %c0_i32 = arith.constant 0 : i32
    %c0_i32_0 = arith.constant 0 : i32
    return %c0_i32 : i32
  }
  func.func @transform_3(%arg0: i32, %arg1: i32) -> (i32, i32, i32) {
    %c0_i32 = arith.constant 0 : i32
    %c0_i32_0 = arith.constant 0 : i32
    return %arg0, %arg1, %c0_i32 : i32, i32, i32
  }
}

</mosaic_0001>

<llo_original>
// kernel: adapter1_forward.1
$region0: #{adapter1_forward.1}
  #allocation0 [shape = 'u32[]', space=smem, size = 0x4, offset = 0x4, fixed_abs, tag = 'smem constant byte address 0x4 - core index']
  #allocation1 [shape = 'u32[144,128]{1,0:T(1,128)}', space=vmem, size = 0x12000, scoped, tag = 'internal scratch']
  #allocation2 [shape = 'f32[64,16]{1,0:T(8,128)}', space=vmem, size = 0x8000, scoped, tag = 'scratch operand']
  #allocation3 [shape = 'f32[1]{0:T(128)S(6)}', space=smem, size = 0x200, scoped, tag = 'scoped memory for adapter1_forward.1']
  %s0 = inlined_call_operand.vmem [shape: f32[2,64,256], index: 0, kind: input, shape index: {}]
  %s1 = inlined_call_operand.vmem [shape: f32[3,192], index: 1, kind: input, shape index: {}]
  %s2 = inlined_call_operand.<no memory space> [shape: f32[1], index: 2, kind: input, shape index: {}]
  %s3 = inlined_call_operand.vmem [shape: f32[2,4,16], index: 3, kind: output, shape index: {}]
  %s4 = sld [smem:[#allocation0]]
  $region45: #{adapter1_forward.1} parent=0
    _
  %s6 = ssub.s32 1, %s4
  %s7 = scalar_select 0, %s6, %s4
  %8 = sst [smem:[#allocation3]] %s2
  loop: start=0, step=1, limit=4
  $region2: #{adapter1_forward.1} parent=0 // loop_pre_header
    _
  $region3: #{adapter1_forward.1} parent=0 // loop_header
    %s10 = sphi 0, %s14
    %p11 = scmp.ge.s32.totalorder %s10, 4
    %s17 = sphi 0, %s29
    %s18 = sphi 0, %s25
    %s19 = sphi 0, %s17
    %s20 = sphi 0, %s18
    %s21 = sphi 0, %s19
    %s22 = sphi 0, %s20
    %s34 = sphi 0, %s36
    %s37 = sphi 0, %s34
    %s38 = sphi 0, %s37
    %s54 = sphi 0, %s38
    %s58 = sphi 0, %s58
    %s60 = sphi 0, %s58
    %s61 = sphi 0, %s60
    %s75 = sphi 0, %s61
    %s79 = sphi 0, %s79
    %s81 = sphi 0, %s79
    %s82 = sphi 0, %s81
    %s96 = sphi 0, %s82
    %s104 = sphi 0, %s106
    %s107 = sphi 0, %s104
    %s108 = sphi 0, %s107
    %s124 = sphi 0, %s108
  $region4: #{adapter1_forward.1} parent=0 // loop_header_branch
    %13 = sbr.rel (%p11) target = $region8
  $region5: #{adapter1_forward.1} parent=0 // loop_body
    %s15 = ssub.s32 %s10, 1
    %s16 = ssub.s32 %s10, 2
    %s23 = sadd.s32 1, %s18
    %p24 = scmp.ge.s32.totalorder %s23, 1
    %s25 = scalar_select %p24, 0, %s23
    %s26 = sadd.s32 1, %s17
    %s27 = scalar_select %p24, %s26, %s17
    %p28 = scmp.ge.s32.totalorder %s27, 2
    %s29 = scalar_select %p28, 0, %s27
    %s30 = ssub.s32 %s17, %s29
    %s31 = ssub.s32 %s18, %s25
    %s32 = sor.u32 %s30, %s31
    %p33 = scmp.eq.s32.totalorder %s32, 0
    %s35 = sadd.s32 %s34, 1
    %s36 = scalar_select %p33, %s34, %s35
    %p39 = pneg %p33
    %p40 = scmp.eq.s32.totalorder %s10, 1
    %p41 = por %p39, %p40
    %p42 = scmp.ne.s32.totalorder %s34, %s37
    %p43 = scmp.eq.s32.totalorder %s10, 0
    %p44 = por %p42, %p43
    %p45 = scmp.ne.s32.totalorder %s34, %s37
    %p46 = scmp.eq.s32.totalorder %s15, 1
    %p47 = por %p45, %p46
    %p48 = scmp.ne.s32.totalorder %s37, %s38
    %p49 = scmp.eq.s32.totalorder %s15, 0
    %p50 = por %p48, %p49
    %p51 = scmp.ne.s32.totalorder %s37, %s38
    %p52 = scmp.eq.s32.totalorder %s16, 1
    %p53 = por %p51, %p52
    %p55 = scmp.ne.s32.totalorder %s38, %s54
    %p56 = scmp.eq.s32.totalorder %s16, 0
    %p57 = por %p55, %p56
    %s59 = sadd.s32 %s58, 1
    %p62 = scmp.eq.s32.totalorder %s10, 1
    %p63 = scmp.ne.s32.totalorder %s58, %s60
    %p64 = scmp.eq.s32.totalorder %s10, 0
    %p65 = por %p63, %p64
    %p66 = scmp.ne.s32.totalorder %s58, %s60
    %p67 = scmp.eq.s32.totalorder %s15, 1
    %p68 = por %p66, %p67
    %p69 = scmp.ne.s32.totalorder %s60, %s61
    %p70 = scmp.eq.s32.totalorder %s15, 0
    %p71 = por %p69, %p70
    %p72 = scmp.ne.s32.totalorder %s60, %s61
    %p73 = scmp.eq.s32.totalorder %s16, 1
    %p74 = por %p72, %p73
    %p76 = scmp.ne.s32.totalorder %s61, %s75
    %p77 = scmp.eq.s32.totalorder %s16, 0
    %p78 = por %p76, %p77
    %s80 = sadd.s32 %s79, 1
    %p83 = scmp.eq.s32.totalorder %s10, 1
    %p84 = scmp.ne.s32.totalorder %s79, %s81
    %p85 = scmp.eq.s32.totalorder %s10, 0
    %p86 = por %p84, %p85
    %p87 = scmp.ne.s32.totalorder %s79, %s81
    %p88 = scmp.eq.s32.totalorder %s15, 1
    %p89 = por %p87, %p88
    %p90 = scmp.ne.s32.totalorder %s81, %s82
    %p91 = scmp.eq.s32.totalorder %s15, 0
    %p92 = por %p90, %p91
    %p93 = scmp.ne.s32.totalorder %s81, %s82
    %p94 = scmp.eq.s32.totalorder %s16, 1
    %p95 = por %p93, %p94
    %p97 = scmp.ne.s32.totalorder %s82, %s96
    %p98 = scmp.eq.s32.totalorder %s16, 0
    %p99 = por %p97, %p98
    %s100 = ssub.s32 %s17, %s29
    %s101 = ssub.s32 %s18, %s25
    %s102 = sor.u32 %s100, %s101
    %p103 = scmp.eq.s32.totalorder %s102, 0
    %s105 = sadd.s32 %s104, 1
    %s106 = scalar_select %p103, %s104, %s105
    %p109 = pneg %p103
    %p110 = scmp.eq.s32.totalorder %s10, 1
    %p111 = por %p109, %p110
    %p112 = scmp.ne.s32.totalorder %s104, %s107
    %p113 = scmp.eq.s32.totalorder %s10, 0
    %p114 = por %p112, %p113
    %p115 = scmp.ne.s32.totalorder %s104, %s107
    %p116 = scmp.eq.s32.totalorder %s15, 1
    %p117 = por %p115, %p116
    %p118 = scmp.ne.s32.totalorder %s107, %s108
    %p119 = scmp.eq.s32.totalorder %s15, 0
    %p120 = por %p118, %p119
    %p121 = scmp.ne.s32.totalorder %s107, %s108
    %p122 = scmp.eq.s32.totalorder %s16, 1
    %p123 = por %p121, %p122
    %p125 = scmp.ne.s32.totalorder %s108, %s124
    %p126 = scmp.eq.s32.totalorder %s16, 0
    %p127 = por %p125, %p126
    %p128 = scmp.le.s32.totalorder 1, %s10
    %p129 = scmp.lt.s32.totalorder %s10, 3
    %p130 = pnand %p128, %p129
    %p131 = pneg %p130
    // Predicated region
    $region9: #{adapter1_forward.1} parent=5 // pred_check
      _
    $region10: #{adapter1_forward.1} parent=5 // pred_check_branch
      %133 = sbr.rel (%p130) target = $region12
    $region11: #{adapter1_forward.1} parent=5 // pred_region
      %s134 = ssub.s32 %s10, 1
      // Predicated region
      $region13: #{adapter1_forward.1} parent=11 // pred_check
        %p135 = pneg %p71
      $region14: #{adapter1_forward.1} parent=11 // pred_check_branch
        %137 = sbr.rel (%p135) target = $region16
      $region15: #{adapter1_forward.1} parent=11 // pred_region
        _
      $region16: #{adapter1_forward.1} parent=11 // pred_fallthru
        _
      // Predicated region
      $region17: #{adapter1_forward.1} parent=11 // pred_check
        %p138 = pneg %p92
      $region18: #{adapter1_forward.1} parent=11 // pred_check_branch
        %140 = sbr.rel (%p138) target = $region20
      $region19: #{adapter1_forward.1} parent=11 // pred_region
        _
      $region20: #{adapter1_forward.1} parent=11 // pred_fallthru
        _
    $region12: #{adapter1_forward.1} parent=5 // pred_fallthru
      _
    %p141 = scmp.lt.s32.totalorder %s10, 2
    // Predicated region
    $region21: #{adapter1_forward.1} parent=5 // pred_check
      %p142 = pneg %p141
    $region22: #{adapter1_forward.1} parent=5 // pred_check_branch
      %144 = sbr.rel (%p142) target = $region24
    $region23: #{adapter1_forward.1} parent=5 // pred_region
      // Predicated region
      $region25: #{adapter1_forward.1} parent=23 // pred_check
        %p145 = pneg %p44
      $region26: #{adapter1_forward.1} parent=23 // pred_check_branch
        %147 = sbr.rel (%p145) target = $region28
      $region27: #{adapter1_forward.1} parent=23 // pred_region
        %s148 = smul.u32 2, %s18
        %p149 = scmp.lt.s32.totalorder %s17, 1
        %s150 = scalar_select %p149, %s17, 1
        %p151 = scmp.lt.s32.totalorder %s148, 1
        %s152 = scalar_select %p151, %s148, 1
        %s153 = smul.addr %s150, 16
        %s154 = sadd.s32 %s152, %s153
        %s155 = smul.addr %s154, 8
        %s156 = scalar_lea.vmem %s0, %s155
        %s157 = smul.u32 2, %s18
      $region28: #{adapter1_forward.1} parent=23 // pred_fallthru
        _
    $region24: #{adapter1_forward.1} parent=5 // pred_fallthru
      _
    %p158 = scmp.le.s32.totalorder 1, %s10
    %p159 = scmp.lt.s32.totalorder %s10, 3
    %p160 = pnand %p158, %p159
    %p161 = pneg %p160
    // Predicated region
    $region29: #{adapter1_forward.1} parent=5 // pred_check
      _
    $region30: #{adapter1_forward.1} parent=5 // pred_check_branch
      %163 = sbr.rel (%p160) target = $region32
    $region31: #{adapter1_forward.1} parent=5 // pred_region
      %s164 = ssub.s32 %s10, 1
      %s165 = smul.u32 2, %s20
      %p166 = scmp.lt.s32.totalorder %s19, 1
      %s167 = scalar_select %p166, %s19, 1
      %p168 = scmp.lt.s32.totalorder %s165, 1
      %s169 = scalar_select %p168, %s165, 1
      %s170 = smul.addr %s167, 16
      %s171 = sadd.s32 %s169, %s170
      %s172 = smul.addr %s171, 8
      %s173 = scalar_lea.vmem %s0, %s172
      %p174 = pneg %p50
      %p175 = pneg %p47
      %p176 = pneg %p71
      %p177 = pneg %p68
      %p178 = pneg %p92
      %p179 = pneg %p89
      %p180 = pneg %p120
      %p181 = pneg %p117
      %p182 = scmp.lt.s32.totalorder %s19, 1
      %s183 = scalar_select %p182, %s19, 1
      %p184 = scmp.lt.s32.totalorder %s20, 0
      %s185 = scalar_select %p184, %s20, 0
      %s186 = sadd.s32 %s185, %s183
      %s187 = smul.addr %s186, 4
      %s188 = scalar_lea.vmem %s3, %s187
      %s189 = smul.u32 2, %s20
      %p190 = scmp.lt.s32.totalorder %s19, 1
      %s191 = scalar_select %p190, %s19, 1
      %p192 = scmp.lt.s32.totalorder %s189, 1
      %s193 = scalar_select %p192, %s189, 1
      %s194 = smul.addr %s191, 16
      %s195 = sadd.s32 %s193, %s194
      %s196 = smul.addr %s195, 8
      %s197 = scalar_lea.vmem %s0, %s196
      %s198 = smul.u32 2, %s20
      %p199 = scmp.lt.s32.totalorder %s19, 1
      %s200 = scalar_select %p199, %s19, 1
      %p201 = scmp.lt.s32.totalorder %s20, 0
      %s202 = scalar_select %p201, %s20, 0
      %s203 = sadd.s32 %s202, %s200
      %s204 = smul.addr %s203, 4
      %s205 = scalar_lea.vmem %s3, %s204
      %s206 = sld [smem:[#allocation3]]
      %v207 = vld [vmem:[%s1] sm:$0x77]
      %v208 = vld [vmem:[%s197] sm:$0xff]
      %v209 = vld [vmem:[%s197 + $0x10] sm:$0xff]
      %v210 = vld [vmem:[%s197 + $0x20] sm:$0xff]
      %v211 = vld [vmem:[%s197 + $0x30] sm:$0xff]
      %v212 = vld [vmem:[%s197 + $0x40] sm:$0xff]
      %v213 = vld [vmem:[%s197 + $0x50] sm:$0xff]
      %v214 = vld [vmem:[%s197 + $0x60] sm:$0xff]
      %v215 = vld [vmem:[%s197 + $0x70] sm:$0xff]
      %224 = vrot.lane.b32.xlu0 %v208, 112
      %v225 = vpop.permute.xlu0 %224
      %226 = vrot.lane.b32.xlu0 %v209, 112
      %v227 = vpop.permute.xlu0 %226
      %228 = vrot.lane.b32.xlu0 %v210, 112
      %v229 = vpop.permute.xlu0 %228
      %230 = vrot.lane.b32.xlu0 %v211, 112
      %v231 = vpop.permute.xlu0 %230
      %232 = vrot.lane.b32.xlu0 %v212, 112
      %v233 = vpop.permute.xlu0 %232
      %234 = vrot.lane.b32.xlu0 %v213, 112
      %v235 = vpop.permute.xlu0 %234
      %236 = vrot.lane.b32.xlu0 %v214, 112
      %v237 = vpop.permute.xlu0 %236
      %238 = vrot.lane.b32.xlu0 %v215, 112
      %v239 = vpop.permute.xlu0 %238
      %v249 = vcombine.high %v207, %v207
      %vm250 = vcmask 523264
      %v251 = vsel %vm250, %v249, 0
      %253 = vmatprep.subr.mxu0 0.0
      %254 = vmatpush1.msra.mxu0 0.0
      %255 = vmatprep.subr.mxu0 0.0
      %256 = vmatpush1.msra.mxu0 0.0
      %257 = vmatprep.subr.mxu0 0.0
      %258 = vmatpush1.msra.mxu0 0.0
      %259 = vmatprep.subr.mxu0 0.0
      %260 = vmatpush1.msra.mxu0 0.0
      %261 = vmatprep.subr.mxu0 0.0
      %262 = vmatpush1.msra.mxu0 0.0
      %263 = vmatprep.subr.mxu0 0.0
      %264 = vmatpush1.msra.mxu0 0.0
      %265 = vmatprep.subr.mxu0 0.0
      %266 = vmatpush1.msra.mxu0 0.0
      %267 = vmatprep.subr.mxu0 0.0
      %268 = vmatpush1.msra.mxu0 0.0
      %269 = vmatprep.subr.mxu0 0.0
      %270 = vmatpush1.msra.mxu0 %v208
      %271 = vmatprep.subr.mxu0 0.0
      %272 = vmatpush1.msra.mxu0 %v209
      %273 = vmatprep.subr.mxu0 0.0
      %274 = vmatpush1.msra.mxu0 %v210
      %275 = vmatprep.subr.mxu0 0.0
      %276 = vmatpush1.msra.mxu0 %v211
      %277 = vmatprep.subr.mxu0 0.0
      %278 = vmatpush1.msra.mxu0 %v212
      %279 = vmatprep.subr.mxu0 0.0
      %280 = vmatpush1.msra.mxu0 %v213
      %281 = vmatprep.subr.mxu0 0.0
      %282 = vmatpush1.msra.mxu0 %v214
      %283 = vmatprep.subr.mxu0 0.0
      %284 = vmatpush1.msra.mxu0 %v215
      %285 = vmatprep.subr.mxu0 0.0
      %286 = vmatpush1.msra.mxu0 %v225
      %287 = vmatprep.subr.mxu0 0.0
      %288 = vmatpush1.msra.mxu0 %v227
      %289 = vmatprep.subr.mxu0 0.0
      %290 = vmatpush1.msra.mxu0 %v229
      %291 = vmatprep.subr.mxu0 0.0
      %292 = vmatpush1.msra.mxu0 %v231
      %293 = vmatprep.subr.mxu0 0.0
      %294 = vmatpush1.msra.mxu0 %v233
      %295 = vmatprep.subr.mxu0 0.0
      %296 = vmatpush1.msra.mxu0 %v235
      %297 = vmatprep.subr.mxu0 0.0
      %298 = vmatpush1.msra.mxu0 %v237
      %299 = vmatprep.subr.mxu0 0.0
      %300 = vmatpush1.msra.mxu0 %v239
      %301 = vmatprep.subr.mxu0 0.0
      %302 = vmatpush1.msra.mxu0 0.0
      %303 = vmatprep.subr.mxu0 0.0
      %304 = vmatpush1.msra.mxu0 0.0
      %305 = vmatprep.subr.mxu0 0.0
      %306 = vmatpush1.msra.mxu0 0.0
      %307 = vmatprep.subr.mxu0 0.0
      %308 = vmatpush1.msra.mxu0 0.0
      %309 = vmatprep.subr.mxu0 0.0
      %310 = vmatpush1.msra.mxu0 0.0
      %311 = vmatprep.subr.mxu0 0.0
      %312 = vmatpush1.msra.mxu0 0.0
      %313 = vmatprep.subr.mxu0 0.0
      %314 = vmatpush1.msra.mxu0 0.0
      %315 = vmatprep.subr.mxu0 0.0
      %316 = vmatpush1.msra.mxu0 0.0
      %317 = vmatprep.mubr.f32.mxu0 %v251
      %318 = vmatmul.mubr.f32.gmra.mrb[0].mxu0 %v207
      %v319 = vpop.f32.mrb[0].mxu0
      %v320 = vadd.f32 0.0, %v319
      %v321 = vpop.f32.mrb[0].mxu0
      %322 = vdwg.mxu0
      %324 = vrot.lane.b32.xlu0 %v320, 1
      %v325 = vpop.permute.xlu0 %324
      %vm327 = vcmask 7168
      %v328 = vsel %vm327, 0.0, %v325
      %329 = vrot.lane.b32.xlu0 %v320, 127
      %v330 = vpop.permute.xlu0 %329
      %vm332 = vcmask 121856
      %v333 = vsel %vm332, %v330, 0.0
      %v335 = vrot.slane %v328, 7
      %v337 = vadd.f32 %v320, %v335
      %v339 = vrot.slane %v333, 1
      %v341 = vadd.f32 %v337, %v339
      %v342 = vstv %s206
      %v343 = vadd.f32 %v341, %v342
      %vm344 = vcmask 123905
      %345 = vst.msk [vmem:[%s205 - $0x1] sm:$0x2] %vm344, %v343
      %v346 = vld [vmem:[%s197] sm:$0xff]
      %v347 = vld [vmem:[%s197 + $0x10] sm:$0xff]
      %v348 = vld [vmem:[%s197 + $0x20] sm:$0xff]
      %v349 = vld [vmem:[%s197 + $0x30] sm:$0xff]
      %v350 = vld [vmem:[%s197 + $0x40] sm:$0xff]
      %v351 = vld [vmem:[%s197 + $0x50] sm:$0xff]
      %v352 = vld [vmem:[%s197 + $0x60] sm:$0xff]
      %v353 = vld [vmem:[%s197 + $0x70] sm:$0xff]
      %362 = vrot.lane.b32.xlu0 %v346, 112
      %v363 = vpop.permute.xlu0 %362
      %364 = vrot.lane.b32.xlu0 %v347, 112
      %v365 = vpop.permute.xlu0 %364
      %366 = vrot.lane.b32.xlu0 %v348, 112
      %v367 = vpop.permute.xlu0 %366
      %368 = vrot.lane.b32.xlu0 %v349, 112
      %v369 = vpop.permute.xlu0 %368
      %370 = vrot.lane.b32.xlu0 %v350, 112
      %v371 = vpop.permute.xlu0 %370
      %372 = vrot.lane.b32.xlu0 %v351, 112
      %v373 = vpop.permute.xlu0 %372
      %374 = vrot.lane.b32.xlu0 %v352, 112
      %v375 = vpop.permute.xlu0 %374
      %376 = vrot.lane.b32.xlu0 %v353, 112
      %v377 = vpop.permute.xlu0 %376
      %378 = vrot.lane.b32.xlu0 %v346, 96
      %v379 = vpop.permute.xlu0 %378
      %380 = vrot.lane.b32.xlu0 %v347, 96
      %v381 = vpop.permute.xlu0 %380
      %382 = vrot.lane.b32.xlu0 %v348, 96
      %v383 = vpop.permute.xlu0 %382
      %384 = vrot.lane.b32.xlu0 %v349, 96
      %v385 = vpop.permute.xlu0 %384
      %386 = vrot.lane.b32.xlu0 %v350, 96
      %v387 = vpop.permute.xlu0 %386
      %388 = vrot.lane.b32.xlu0 %v351, 96
      %v389 = vpop.permute.xlu0 %388
      %390 = vrot.lane.b32.xlu0 %v352, 96
      %v391 = vpop.permute.xlu0 %390
      %392 = vrot.lane.b32.xlu0 %v353, 96
      %v393 = vpop.permute.xlu0 %392
      %394 = vrot.lane.b32.xlu0 %v346, 80
      %v395 = vpop.permute.xlu0 %394
      %396 = vrot.lane.b32.xlu0 %v347, 80
      %v397 = vpop.permute.xlu0 %396
      %398 = vrot.lane.b32.xlu0 %v348, 80
      %v399 = vpop.permute.xlu0 %398
      %400 = vrot.lane.b32.xlu0 %v349, 80
      %v401 = vpop.permute.xlu0 %400
      %402 = vrot.lane.b32.xlu0 %v350, 80
      %v403 = vpop.permute.xlu0 %402
      %404 = vrot.lane.b32.xlu0 %v351, 80
      %v405 = vpop.permute.xlu0 %404
      %406 = vrot.lane.b32.xlu0 %v352, 80
      %v407 = vpop.permute.xlu0 %406
      %408 = vrot.lane.b32.xlu0 %v353, 80
      %v409 = vpop.permute.xlu0 %408
      %410 = vrot.lane.b32.xlu0 %v363, 80
      %v411 = vpop.permute.xlu0 %410
      %412 = vrot.lane.b32.xlu0 %v365, 80
      %v413 = vpop.permute.xlu0 %412
      %414 = vrot.lane.b32.xlu0 %v367, 80
      %v415 = vpop.permute.xlu0 %414
      %416 = vrot.lane.b32.xlu0 %v369, 80
      %v417 = vpop.permute.xlu0 %416
      %418 = vrot.lane.b32.xlu0 %v371, 80
      %v419 = vpop.permute.xlu0 %418
      %420 = vrot.lane.b32.xlu0 %v373, 80
      %v421 = vpop.permute.xlu0 %420
      %422 = vrot.lane.b32.xlu0 %v375, 80
      %v423 = vpop.permute.xlu0 %422
      %424 = vrot.lane.b32.xlu0 %v377, 80
      %v425 = vpop.permute.xlu0 %424
      %426 = vrot.lane.b32.xlu0 %v379, 80
      %v427 = vpop.permute.xlu0 %426
      %428 = vrot.lane.b32.xlu0 %v381, 80
      %v429 = vpop.permute.xlu0 %428
      %430 = vrot.lane.b32.xlu0 %v383, 80
      %v431 = vpop.permute.xlu0 %430
      %432 = vrot.lane.b32.xlu0 %v385, 80
      %v433 = vpop.permute.xlu0 %432
      %434 = vrot.lane.b32.xlu0 %v387, 80
      %v435 = vpop.permute.xlu0 %434
      %436 = vrot.lane.b32.xlu0 %v389, 80
      %v437 = vpop.permute.xlu0 %436
      %438 = vrot.lane.b32.xlu0 %v391, 80
      %v439 = vpop.permute.xlu0 %438
      %440 = vrot.lane.b32.xlu0 %v393, 80
      %v441 = vpop.permute.xlu0 %440
      %466 = vmatprep.subr.mxu0 0.0
      %467 = vmatpush1.msra.mxu0 %v395
      %468 = vmatprep.subr.mxu0 0.0
      %469 = vmatpush1.msra.mxu0 %v397
      %470 = vmatprep.subr.mxu0 0.0
      %471 = vmatpush1.msra.mxu0 %v399
      %472 = vmatprep.subr.mxu0 0.0
      %473 = vmatpush1.msra.mxu0 %v401
      %474 = vmatprep.subr.mxu0 0.0
      %475 = vmatpush1.msra.mxu0 %v403
      %476 = vmatprep.subr.mxu0 0.0
      %477 = vmatpush1.msra.mxu0 %v405
      %478 = vmatprep.subr.mxu0 0.0
      %479 = vmatpush1.msra.mxu0 %v407
      %480 = vmatprep.subr.mxu0 0.0
      %481 = vmatpush1.msra.mxu0 %v409
      %482 = vmatprep.subr.mxu0 0.0
      %483 = vmatpush1.msra.mxu0 %v411
      %484 = vmatprep.subr.mxu0 0.0
      %485 = vmatpush1.msra.mxu0 %v413
      %486 = vmatprep.subr.mxu0 0.0
      %487 = vmatpush1.msra.mxu0 %v415
      %488 = vmatprep.subr.mxu0 0.0
      %489 = vmatpush1.msra.mxu0 %v417
      %490 = vmatprep.subr.mxu0 0.0
      %491 = vmatpush1.msra.mxu0 %v419
      %492 = vmatprep.subr.mxu0 0.0
      %493 = vmatpush1.msra.mxu0 %v421
      %494 = vmatprep.subr.mxu0 0.0
      %495 = vmatpush1.msra.mxu0 %v423
      %496 = vmatprep.subr.mxu0 0.0
      %497 = vmatpush1.msra.mxu0 %v425
      %498 = vmatprep.subr.mxu0 0.0
      %499 = vmatpush1.msra.mxu0 %v427
      %500 = vmatprep.subr.mxu0 0.0
      %501 = vmatpush1.msra.mxu0 %v429
      %502 = vmatprep.subr.mxu0 0.0
      %503 = vmatpush1.msra.mxu0 %v431
      %504 = vmatprep.subr.mxu0 0.0
      %505 = vmatpush1.msra.mxu0 %v433
      %506 = vmatprep.subr.mxu0 0.0
      %507 = vmatpush1.msra.mxu0 %v435
      %508 = vmatprep.subr.mxu0 0.0
      %509 = vmatpush1.msra.mxu0 %v437
      %510 = vmatprep.subr.mxu0 0.0
      %511 = vmatpush1.msra.mxu0 %v439
      %512 = vmatprep.subr.mxu0 0.0
      %513 = vmatpush1.msra.mxu0 %v441
      %514 = vmatprep.subr.mxu0 0.0
      %515 = vmatpush1.msra.mxu0 0.0
      %516 = vmatprep.subr.mxu0 0.0
      %517 = vmatpush1.msra.mxu0 0.0
      %518 = vmatprep.subr.mxu0 0.0
      %519 = vmatpush1.msra.mxu0 0.0
      %520 = vmatprep.subr.mxu0 0.0
      %521 = vmatpush1.msra.mxu0 0.0
      %522 = vmatprep.subr.mxu0 0.0
      %523 = vmatpush1.msra.mxu0 0.0
      %524 = vmatprep.subr.mxu0 0.0
      %525 = vmatpush1.msra.mxu0 0.0
      %526 = vmatprep.subr.mxu0 0.0
      %527 = vmatpush1.msra.mxu0 0.0
      %528 = vmatprep.subr.mxu0 0.0
      %529 = vmatpush1.msra.mxu0 0.0
      %530 = vmatprep.mubr.f32.mxu0 %v251
      %531 = vmatmul.mubr.f32.gmra.mrb[0].mxu0 %v207
      %v532 = vpop.f32.mrb[0].mxu0
      %v533 = vadd.f32 0.0, %v532
      %v534 = vpop.f32.mrb[0].mxu0
      %535 = vdwg.mxu0
      %537 = vrot.lane.b32.xlu0 %v533, 1
      %v538 = vpop.permute.xlu0 %537
      %v540 = vsel %vm327, 0.0, %v538
      %541 = vrot.lane.b32.xlu0 %v533, 127
      %v542 = vpop.permute.xlu0 %541
      %v544 = vsel %vm332, %v542, 0.0
      %v546 = vrot.slane %v540, 7
      %v548 = vadd.f32 %v533, %v546
      %v550 = vrot.slane %v544, 1
      %v552 = vadd.f32 %v548, %v550
      %v553 = vadd.f32 %v552, %v342
      %554 = vst.msk [vmem:[%s205] sm:$0x2] %vm344, %v553
      %v555 = vld [vmem:[%s197] sm:$0xff]
      %v556 = vld [vmem:[%s197 + $0x10] sm:$0xff]
      %v557 = vld [vmem:[%s197 + $0x20] sm:$0xff]
      %v558 = vld [vmem:[%s197 + $0x30] sm:$0xff]
      %v559 = vld [vmem:[%s197 + $0x40] sm:$0xff]
      %v560 = vld [vmem:[%s197 + $0x50] sm:$0xff]
      %v561 = vld [vmem:[%s197 + $0x60] sm:$0xff]
      %v562 = vld [vmem:[%s197 + $0x70] sm:$0xff]
      %v563 = vld [vmem:[%s197 + $0x8] sm:$0xff]
      %v564 = vld [vmem:[%s197 + $0x18] sm:$0xff]
      %v565 = vld [vmem:[%s197 + $0x28] sm:$0xff]
      %v566 = vld [vmem:[%s197 + $0x38] sm:$0xff]
      %v567 = vld [vmem:[%s197 + $0x48] sm:$0xff]
      %v568 = vld [vmem:[%s197 + $0x58] sm:$0xff]
      %v569 = vld [vmem:[%s197 + $0x68] sm:$0xff]
      %v570 = vld [vmem:[%s197 + $0x78] sm:$0xff]
      %579 = vrot.lane.b32.xlu0 %v563, 112
      %v580 = vpop.permute.xlu0 %579
      %581 = vrot.lane.b32.xlu0 %v564, 112
      %v582 = vpop.permute.xlu0 %581
      %583 = vrot.lane.b32.xlu0 %v565, 112
      %v584 = vpop.permute.xlu0 %583
      %585 = vrot.lane.b32.xlu0 %v566, 112
      %v586 = vpop.permute.xlu0 %585
      %587 = vrot.lane.b32.xlu0 %v567, 112
      %v588 = vpop.permute.xlu0 %587
      %589 = vrot.lane.b32.xlu0 %v568, 112
      %v590 = vpop.permute.xlu0 %589
      %591 = vrot.lane.b32.xlu0 %v569, 112
      %v592 = vpop.permute.xlu0 %591
      %593 = vrot.lane.b32.xlu0 %v570, 112
      %v594 = vpop.permute.xlu0 %593
      %595 = vrot.lane.b32.xlu0 %v563, 96
      %v596 = vpop.permute.xlu0 %595
      %597 = vrot.lane.b32.xlu0 %v564, 96
      %v598 = vpop.permute.xlu0 %597
      %599 = vrot.lane.b32.xlu0 %v565, 96
      %v600 = vpop.permute.xlu0 %599
      %601 = vrot.lane.b32.xlu0 %v566, 96
      %v602 = vpop.permute.xlu0 %601
      %603 = vrot.lane.b32.xlu0 %v567, 96
      %v604 = vpop.permute.xlu0 %603
      %605 = vrot.lane.b32.xlu0 %v568, 96
      %v606 = vpop.permute.xlu0 %605
      %607 = vrot.lane.b32.xlu0 %v569, 96
      %v608 = vpop.permute.xlu0 %607
      %609 = vrot.lane.b32.xlu0 %v570, 96
      %v610 = vpop.permute.xlu0 %609
      %619 = vrot.lane.b32.xlu0 %v555, 16
      %v620 = vpop.permute.xlu0 %619
      %621 = vrot.lane.b32.xlu0 %v556, 16
      %v622 = vpop.permute.xlu0 %621
      %623 = vrot.lane.b32.xlu0 %v557, 16
      %v624 = vpop.permute.xlu0 %623
      %625 = vrot.lane.b32.xlu0 %v558, 16
      %v626 = vpop.permute.xlu0 %625
      %627 = vrot.lane.b32.xlu0 %v559, 16
      %v628 = vpop.permute.xlu0 %627
      %629 = vrot.lane.b32.xlu0 %v560, 16
      %v630 = vpop.permute.xlu0 %629
      %631 = vrot.lane.b32.xlu0 %v561, 16
      %v632 = vpop.permute.xlu0 %631
      %633 = vrot.lane.b32.xlu0 %v562, 16
      %v634 = vpop.permute.xlu0 %633
      %635 = vrot.lane.b32.xlu0 %v580, 16
      %v636 = vpop.permute.xlu0 %635
      %637 = vrot.lane.b32.xlu0 %v582, 16
      %v638 = vpop.permute.xlu0 %637
      %639 = vrot.lane.b32.xlu0 %v584, 16
      %v640 = vpop.permute.xlu0 %639
      %641 = vrot.lane.b32.xlu0 %v586, 16
      %v642 = vpop.permute.xlu0 %641
      %643 = vrot.lane.b32.xlu0 %v588, 16
      %v644 = vpop.permute.xlu0 %643
      %645 = vrot.lane.b32.xlu0 %v590, 16
      %v646 = vpop.permute.xlu0 %645
      %647 = vrot.lane.b32.xlu0 %v592, 16
      %v648 = vpop.permute.xlu0 %647
      %649 = vrot.lane.b32.xlu0 %v594, 16
      %v650 = vpop.permute.xlu0 %649
      %651 = vrot.lane.b32.xlu0 %v596, 16
      %v652 = vpop.permute.xlu0 %651
      %653 = vrot.lane.b32.xlu0 %v598, 16
      %v654 = vpop.permute.xlu0 %653
      %655 = vrot.lane.b32.xlu0 %v600, 16
      %v656 = vpop.permute.xlu0 %655
      %657 = vrot.lane.b32.xlu0 %v602, 16
      %v658 = vpop.permute.xlu0 %657
      %659 = vrot.lane.b32.xlu0 %v604, 16
      %v660 = vpop.permute.xlu0 %659
      %661 = vrot.lane.b32.xlu0 %v606, 16
      %v662 = vpop.permute.xlu0 %661
      %663 = vrot.lane.b32.xlu0 %v608, 16
      %v664 = vpop.permute.xlu0 %663
      %665 = vrot.lane.b32.xlu0 %v610, 16
      %v666 = vpop.permute.xlu0 %665
      %691 = vmatprep.subr.mxu0 0.0
      %692 = vmatpush1.msra.mxu0 %v620
      %693 = vmatprep.subr.mxu0 0.0
      %694 = vmatpush1.msra.mxu0 %v622
      %695 = vmatprep.subr.mxu0 0.0
      %696 = vmatpush1.msra.mxu0 %v624
      %697 = vmatprep.subr.mxu0 0.0
      %698 = vmatpush1.msra.mxu0 %v626
      %699 = vmatprep.subr.mxu0 0.0
      %700 = vmatpush1.msra.mxu0 %v628
      %701 = vmatprep.subr.mxu0 0.0
      %702 = vmatpush1.msra.mxu0 %v630
      %703 = vmatprep.subr.mxu0 0.0
      %704 = vmatpush1.msra.mxu0 %v632
      %705 = vmatprep.subr.mxu0 0.0
      %706 = vmatpush1.msra.mxu0 %v634
      %707 = vmatprep.subr.mxu0 0.0
      %708 = vmatpush1.msra.mxu0 %v636
      %709 = vmatprep.subr.mxu0 0.0
      %710 = vmatpush1.msra.mxu0 %v638
      %711 = vmatprep.subr.mxu0 0.0
      %712 = vmatpush1.msra.mxu0 %v640
      %713 = vmatprep.subr.mxu0 0.0
      %714 = vmatpush1.msra.mxu0 %v642
      %715 = vmatprep.subr.mxu0 0.0
      %716 = vmatpush1.msra.mxu0 %v644
      %717 = vmatprep.subr.mxu0 0.0
      %718 = vmatpush1.msra.mxu0 %v646
      %719 = vmatprep.subr.mxu0 0.0
      %720 = vmatpush1.msra.mxu0 %v648
      %721 = vmatprep.subr.mxu0 0.0
      %722 = vmatpush1.msra.mxu0 %v650
      %723 = vmatprep.subr.mxu0 0.0
      %724 = vmatpush1.msra.mxu0 %v652
      %725 = vmatprep.subr.mxu0 0.0
      %726 = vmatpush1.msra.mxu0 %v654
      %727 = vmatprep.subr.mxu0 0.0
      %728 = vmatpush1.msra.mxu0 %v656
      %729 = vmatprep.subr.mxu0 0.0
      %730 = vmatpush1.msra.mxu0 %v658
      %731 = vmatprep.subr.mxu0 0.0
      %732 = vmatpush1.msra.mxu0 %v660
      %733 = vmatprep.subr.mxu0 0.0
      %734 = vmatpush1.msra.mxu0 %v662
      %735 = vmatprep.subr.mxu0 0.0
      %736 = vmatpush1.msra.mxu0 %v664
      %737 = vmatprep.subr.mxu0 0.0
      %738 = vmatpush1.msra.mxu0 %v666
      %739 = vmatprep.subr.mxu0 0.0
      %740 = vmatpush1.msra.mxu0 0.0
      %741 = vmatprep.subr.mxu0 0.0
      %742 = vmatpush1.msra.mxu0 0.0
      %743 = vmatprep.subr.mxu0 0.0
      %744 = vmatpush1.msra.mxu0 0.0
      %745 = vmatprep.subr.mxu0 0.0
      %746 = vmatpush1.msra.mxu0 0.0
      %747 = vmatprep.subr.mxu0 0.0
      %748 = vmatpush1.msra.mxu0 0.0
      %749 = vmatprep.subr.mxu0 0.0
      %750 = vmatpush1.msra.mxu0 0.0
      %751 = vmatprep.subr.mxu0 0.0
      %752 = vmatpush1.msra.mxu0 0.0
      %753 = vmatprep.subr.mxu0 0.0
      %754 = vmatpush1.msra.mxu0 0.0
      %755 = vmatprep.mubr.f32.mxu0 %v251
      %756 = vmatmul.mubr.f32.gmra.mrb[0].mxu0 %v207
      %v757 = vpop.f32.mrb[0].mxu0
      %v758 = vadd.f32 0.0, %v757
      %v759 = vpop.f32.mrb[0].mxu0
      %760 = vdwg.mxu0
      %762 = vrot.lane.b32.xlu0 %v758, 1
      %v763 = vpop.permute.xlu0 %762
      %v765 = vsel %vm327, 0.0, %v763
      %766 = vrot.lane.b32.xlu0 %v758, 127
      %v767 = vpop.permute.xlu0 %766
      %v769 = vsel %vm332, %v767, 0.0
      %v771 = vrot.slane %v765, 7
      %v773 = vadd.f32 %v758, %v771
      %v775 = vrot.slane %v769, 1
      %v777 = vadd.f32 %v773, %v775
      %v778 = vadd.f32 %v777, %v342
      %779 = vst.msk [vmem:[%s205 + $0x1] sm:$0x2] %vm344, %v778
      %v780 = vld [vmem:[%s197 + $0x8] sm:$0xff]
      %v781 = vld [vmem:[%s197 + $0x18] sm:$0xff]
      %v782 = vld [vmem:[%s197 + $0x28] sm:$0xff]
      %v783 = vld [vmem:[%s197 + $0x38] sm:$0xff]
      %v784 = vld [vmem:[%s197 + $0x48] sm:$0xff]
      %v785 = vld [vmem:[%s197 + $0x58] sm:$0xff]
      %v786 = vld [vmem:[%s197 + $0x68] sm:$0xff]
      %v787 = vld [vmem:[%s197 + $0x78] sm:$0xff]
      %796 = vrot.lane.b32.xlu0 %v780, 112
      %v797 = vpop.permute.xlu0 %796
      %798 = vrot.lane.b32.xlu0 %v781, 112
      %v799 = vpop.permute.xlu0 %798
      %800 = vrot.lane.b32.xlu0 %v782, 112
      %v801 = vpop.permute.xlu0 %800
      %802 = vrot.lane.b32.xlu0 %v783, 112
      %v803 = vpop.permute.xlu0 %802
      %804 = vrot.lane.b32.xlu0 %v784, 112
      %v805 = vpop.permute.xlu0 %804
      %806 = vrot.lane.b32.xlu0 %v785, 112
      %v807 = vpop.permute.xlu0 %806
      %808 = vrot.lane.b32.xlu0 %v786, 112
      %v809 = vpop.permute.xlu0 %808
      %810 = vrot.lane.b32.xlu0 %v787, 112
      %v811 = vpop.permute.xlu0 %810
      %812 = vrot.lane.b32.xlu0 %v780, 96
      %v813 = vpop.permute.xlu0 %812
      %814 = vrot.lane.b32.xlu0 %v781, 96
      %v815 = vpop.permute.xlu0 %814
      %816 = vrot.lane.b32.xlu0 %v782, 96
      %v817 = vpop.permute.xlu0 %816
      %818 = vrot.lane.b32.xlu0 %v783, 96
      %v819 = vpop.permute.xlu0 %818
      %820 = vrot.lane.b32.xlu0 %v784, 96
      %v821 = vpop.permute.xlu0 %820
      %822 = vrot.lane.b32.xlu0 %v785, 96
      %v823 = vpop.permute.xlu0 %822
      %824 = vrot.lane.b32.xlu0 %v786, 96
      %v825 = vpop.permute.xlu0 %824
      %826 = vrot.lane.b32.xlu0 %v787, 96
      %v827 = vpop.permute.xlu0 %826
      %828 = vrot.lane.b32.xlu0 %v780, 80
      %v829 = vpop.permute.xlu0 %828
      %830 = vrot.lane.b32.xlu0 %v781, 80
      %v831 = vpop.permute.xlu0 %830
      %832 = vrot.lane.b32.xlu0 %v782, 80
      %v833 = vpop.permute.xlu0 %832
      %834 = vrot.lane.b32.xlu0 %v783, 80
      %v835 = vpop.permute.xlu0 %834
      %836 = vrot.lane.b32.xlu0 %v784, 80
      %v837 = vpop.permute.xlu0 %836
      %838 = vrot.lane.b32.xlu0 %v785, 80
      %v839 = vpop.permute.xlu0 %838
      %840 = vrot.lane.b32.xlu0 %v786, 80
      %v841 = vpop.permute.xlu0 %840
      %842 = vrot.lane.b32.xlu0 %v787, 80
      %v843 = vpop.permute.xlu0 %842
      %844 = vrot.lane.b32.xlu0 %v797, 80
      %v845 = vpop.permute.xlu0 %844
      %846 = vrot.lane.b32.xlu0 %v799, 80
      %v847 = vpop.permute.xlu0 %846
      %848 = vrot.lane.b32.xlu0 %v801, 80
      %v849 = vpop.permute.xlu0 %848
      %850 = vrot.lane.b32.xlu0 %v803, 80
      %v851 = vpop.permute.xlu0 %850
      %852 = vrot.lane.b32.xlu0 %v805, 80
      %v853 = vpop.permute.xlu0 %852
      %854 = vrot.lane.b32.xlu0 %v807, 80
      %v855 = vpop.permute.xlu0 %854
      %856 = vrot.lane.b32.xlu0 %v809, 80
      %v857 = vpop.permute.xlu0 %856
      %858 = vrot.lane.b32.xlu0 %v811, 80
      %v859 = vpop.permute.xlu0 %858
      %860 = vrot.lane.b32.xlu0 %v813, 80
      %v861 = vpop.permute.xlu0 %860
      %862 = vrot.lane.b32.xlu0 %v815, 80
      %v863 = vpop.permute.xlu0 %862
      %864 = vrot.lane.b32.xlu0 %v817, 80
      %v865 = vpop.permute.xlu0 %864
      %866 = vrot.lane.b32.xlu0 %v819, 80
      %v867 = vpop.permute.xlu0 %866
      %868 = vrot.lane.b32.xlu0 %v821, 80
      %v869 = vpop.permute.xlu0 %868
      %870 = vrot.lane.b32.xlu0 %v823, 80
      %v871 = vpop.permute.xlu0 %870
      %872 = vrot.lane.b32.xlu0 %v825, 80
      %v873 = vpop.permute.xlu0 %872
      %874 = vrot.lane.b32.xlu0 %v827, 80
      %v875 = vpop.permute.xlu0 %874
      %900 = vmatprep.subr.mxu0 0.0
      %901 = vmatpush1.msra.mxu0 %v829
      %902 = vmatprep.subr.mxu0 0.0
      %903 = vmatpush1.msra.mxu0 %v831
      %904 = vmatprep.subr.mxu0 0.0
      %905 = vmatpush1.msra.mxu0 %v833
      %906 = vmatprep.subr.mxu0 0.0
      %907 = vmatpush1.msra.mxu0 %v835
      %908 = vmatprep.subr.mxu0 0.0
      %909 = vmatpush1.msra.mxu0 %v837
      %910 = vmatprep.subr.mxu0 0.0
      %911 = vmatpush1.msra.mxu0 %v839
      %912 = vmatprep.subr.mxu0 0.0
      %913 = vmatpush1.msra.mxu0 %v841
      %914 = vmatprep.subr.mxu0 0.0
      %915 = vmatpush1.msra.mxu0 %v843
      %916 = vmatprep.subr.mxu0 0.0
      %917 = vmatpush1.msra.mxu0 %v845
      %918 = vmatprep.subr.mxu0 0.0
      %919 = vmatpush1.msra.mxu0 %v847
      %920 = vmatprep.subr.mxu0 0.0
      %921 = vmatpush1.msra.mxu0 %v849
      %922 = vmatprep.subr.mxu0 0.0
      %923 = vmatpush1.msra.mxu0 %v851
      %924 = vmatprep.subr.mxu0 0.0
      %925 = vmatpush1.msra.mxu0 %v853
      %926 = vmatprep.subr.mxu0 0.0
      %927 = vmatpush1.msra.mxu0 %v855
      %928 = vmatprep.subr.mxu0 0.0
      %929 = vmatpush1.msra.mxu0 %v857
      %930 = vmatprep.subr.mxu0 0.0
      %931 = vmatpush1.msra.mxu0 %v859
      %932 = vmatprep.subr.mxu0 0.0
      %933 = vmatpush1.msra.mxu0 %v861
      %934 = vmatprep.subr.mxu0 0.0
      %935 = vmatpush1.msra.mxu0 %v863
      %936 = vmatprep.subr.mxu0 0.0
      %937 = vmatpush1.msra.mxu0 %v865
      %938 = vmatprep.subr.mxu0 0.0
      %939 = vmatpush1.msra.mxu0 %v867
      %940 = vmatprep.subr.mxu0 0.0
      %941 = vmatpush1.msra.mxu0 %v869
      %942 = vmatprep.subr.mxu0 0.0
      %943 = vmatpush1.msra.mxu0 %v871
      %944 = vmatprep.subr.mxu0 0.0
      %945 = vmatpush1.msra.mxu0 %v873
      %946 = vmatprep.subr.mxu0 0.0
      %947 = vmatpush1.msra.mxu0 %v875
      %948 = vmatprep.subr.mxu0 0.0
      %949 = vmatpush1.msra.mxu0 0.0
      %950 = vmatprep.subr.mxu0 0.0
      %951 = vmatpush1.msra.mxu0 0.0
      %952 = vmatprep.subr.mxu0 0.0
      %953 = vmatpush1.msra.mxu0 0.0
      %954 = vmatprep.subr.mxu0 0.0
      %955 = vmatpush1.msra.mxu0 0.0
      %956 = vmatprep.subr.mxu0 0.0
      %957 = vmatpush1.msra.mxu0 0.0
      %958 = vmatprep.subr.mxu0 0.0
      %959 = vmatpush1.msra.mxu0 0.0
      %960 = vmatprep.subr.mxu0 0.0
      %961 = vmatpush1.msra.mxu0 0.0
      %962 = vmatprep.subr.mxu0 0.0
      %963 = vmatpush1.msra.mxu0 0.0
      %964 = vmatprep.mubr.f32.mxu0 %v251
      %965 = vmatmul.mubr.f32.gmra.mrb[0].mxu0 %v207
      %v966 = vpop.f32.mrb[0].mxu0
      %v967 = vadd.f32 0.0, %v966
      %v968 = vpop.f32.mrb[0].mxu0
      %969 = vdwg.mxu0
      %971 = vrot.lane.b32.xlu0 %v967, 1
      %v972 = vpop.permute.xlu0 %971
      %v974 = vsel %vm327, 0.0, %v972
      %975 = vrot.lane.b32.xlu0 %v967, 127
      %v976 = vpop.permute.xlu0 %975
      %v978 = vsel %vm332, %v976, 0.0
      %v980 = vrot.slane %v974, 7
      %v982 = vadd.f32 %v967, %v980
      %v984 = vrot.slane %v978, 1
      %v986 = vadd.f32 %v982, %v984
      %v987 = vadd.f32 %v986, %v342
      %988 = vst.msk [vmem:[%s205 + $0x2] sm:$0x2] %vm344, %v987
      %p989 = scmp.lt.s32.totalorder %s19, 1
      %s990 = scalar_select %p989, %s19, 1
      %p991 = scmp.lt.s32.totalorder %s20, 0
      %s992 = scalar_select %p991, %s20, 0
      %s993 = sadd.s32 %s992, %s990
      %s994 = smul.addr %s993, 4
      %s995 = scalar_lea.vmem %s3, %s994
      // Predicated region
      $region33: #{adapter1_forward.1} parent=31 // pred_check
        %p996 = pneg %p117
      $region34: #{adapter1_forward.1} parent=31 // pred_check_branch
        %998 = sbr.rel (%p996) target = $region36
      $region35: #{adapter1_forward.1} parent=31 // pred_region
        _
      $region36: #{adapter1_forward.1} parent=31 // pred_fallthru
        _
    $region32: #{adapter1_forward.1} parent=5 // pred_fallthru
      _
    %p999 = scmp.le.s32.totalorder 2, %s10
    // Predicated region
    $region37: #{adapter1_forward.1} parent=5 // pred_check
      %p1000 = pneg %p999
    $region38: #{adapter1_forward.1} parent=5 // pred_check_branch
      %1002 = sbr.rel (%p1000) target = $region40
    $region39: #{adapter1_forward.1} parent=5 // pred_region
      %s1003 = ssub.s32 %s10, 2
      // Predicated region
      $region41: #{adapter1_forward.1} parent=39 // pred_check
        %p1004 = pneg %p123
      $region42: #{adapter1_forward.1} parent=39 // pred_check_branch
        %1006 = sbr.rel (%p1004) target = $region44
      $region43: #{adapter1_forward.1} parent=39 // pred_region
        %p1007 = scmp.lt.s32.totalorder %s21, 1
        %s1008 = scalar_select %p1007, %s21, 1
        %p1009 = scmp.lt.s32.totalorder %s22, 0
        %s1010 = scalar_select %p1009, %s22, 0
        %s1011 = sadd.s32 %s1010, %s1008
        %s1012 = smul.addr %s1011, 4
        %s1013 = scalar_lea.vmem %s3, %s1012
      $region44: #{adapter1_forward.1} parent=39 // pred_fallthru
        _
    $region40: #{adapter1_forward.1} parent=5 // pred_fallthru
      _
  $region6: #{adapter1_forward.1} parent=0 // loop_footer
    %s14 = sadd.s32 1, %s10
  $region7: #{adapter1_forward.1} parent=0 // loop_footer_branch
    %9 = sbr.rel target = $region3
  $region8: #{adapter1_forward.1} parent=0 // loop_exit
    _

</llo_original>
